<compile_context>
chip_gen: v7x
topology: tpu7x:2x2x1
jax: 0.10.0
libtpu: 0.0.40
codegen_flags: <defaults>
</compile_context>

<pallas_src>
import jax
import jax.numpy as jnp
from jax.experimental import pallas as pl
from jax.experimental.pallas import tpu as pltpu

_EPS = 1e-8
_LANE = 128
_MAX_TILE_ROWS = 1024  # 1024x128 f32 = 512 KiB/block; x2 inputs x2 buffers = 2 MiB


def _cdiv(a, b):
    return -(-a // b)


def _round_up(a, b):
    return _cdiv(a, b) * b


def _make_kernel(steps, tile_rows, valid_rows, need_mask):
    groups = tile_rows // 8

    def kernel(out_ref, tgt_ref, sum_ref):
        c = pl.program_id(0)   # "parallel" split (megacore sharding on v7x)
        i = pl.program_id(1)   # reduction steps within the split

        @pl.when(i == 0)
        def _():
            sum_ref[...] = jnp.zeros_like(sum_ref)

        o = out_ref[...].astype(jnp.float32)
        t = tgt_ref[...].astype(jnp.float32)
        r = jnp.log((t + _EPS) / (o + _EPS))
        rr = r * r

        if need_mask:
            # Mask rows past the valid extent: covers both the partial last
            # block and any clamped/duplicated block of the parallel split.
            row0 = (c * steps + i) * tile_rows
            row_ids = row0 + jax.lax.broadcasted_iota(jnp.int32, rr.shape, 0)
            rr = jnp.where(row_ids < valid_rows, rr, 0.0)

        # Fold (tile_rows, 128) -> (8, 128) with a balanced tree of plain
        # sublane-aligned vreg adds (VPU only; no XLU reduce inside the loop).
        parts = [rr[8 * g:8 * (g + 1), :] for g in range(groups)]
        while len(parts) > 1:
            nxt = [parts[a] + parts[a + 1] for a in range(0, len(parts) - 1, 2)]
            if len(parts) % 2:
                nxt.append(parts[-1])
            parts = nxt
        sum_ref[...] += parts[0]

    return kernel


def log_squared_loss(output, target):
    """Pallas equivalent of LogSquaredLoss.forward (returns scalar f32)."""
    assert output.shape == target.shape
    n = output.size
    assert n > 0

    flat_o = output.reshape(-1)
    flat_t = target.reshape(-1)

    # Lane-tail pad (<128 elems) with the neutral value 1.0 -> log(1) = 0.
    rem = n % _LANE
    if rem:
        pad = _LANE - rem
        flat_o = jnp.pad(flat_o, (0, pad), constant_values=1.0)
        flat_t = jnp.pad(flat_t, (0, pad), constant_values=1.0)

    rows = flat_o.size // _LANE
    o2 = flat_o.reshape(rows, _LANE)
    t2 = flat_t.reshape(rows, _LANE)

    # Sublane multiple for the input dtype (8 f32, 16 bf16/f16, 32 8-bit);
    # pad at most sub-1 neutral rows so the 2D arrays are tile-aligned.
    sub = 8 * max(1, 4 // jnp.dtype(output.dtype).itemsize)
    rows_p = _round_up(rows, sub)
    if rows_p != rows:
        o2 = jnp.pad(o2, ((0, rows_p - rows), (0, 0)), constant_values=1.0)
        t2 = jnp.pad(t2, ((0, rows_p - rows), (0, 0)), constant_values=1.0)

    tile_rows = min(_MAX_TILE_ROWS, rows_p)
    num_blocks = _cdiv(rows_p, tile_rows)
    n_splits = 2 if num_blocks >= 2 else 1      # feed both TensorCores on v7x
    steps = _cdiv(num_blocks, n_splits)
    need_clamp = n_splits * steps != num_blocks
    need_mask = n_splits * steps * tile_rows != rows_p

    def in_index_map(c, i):
        blk = c * steps + i
        if need_clamp:
            blk = jnp.minimum(blk, num_blocks - 1)  # duplicate block -> masked
        return (blk, 0)

    in_spec = pl.BlockSpec((tile_rows, _LANE), in_index_map)

    partials = pl.pallas_call(
        _make_kernel(steps, tile_rows, rows_p, need_mask),
        out_shape=jax.ShapeDtypeStruct((8 * n_splits, _LANE), jnp.float32),
        grid=(n_splits, steps),
        in_specs=[in_spec, in_spec],
        out_specs=pl.BlockSpec((8, _LANE), lambda c, i: (c, 0)),
        compiler_params=pltpu.CompilerParams(
            dimension_semantics=("parallel", "arbitrary")),
    )(o2, t2)

    # Tiny final reduce of 8*128*n_splits partials + mean normalization.
    return jnp.sum(partials) / jnp.float32(n)


def _reference(output, target):
    return jnp.mean(jnp.log((target + _EPS) / (output + _EPS)) ** 2)


if __name__ == "__main__":
    key = jax.random.PRNGKey(0)

    # (1) Canonical small NCHW shape (exact lane/tile fit, single block).
    # (2) Shape exercising the multi-block grid, 2-way parallel split,
    #     in-kernel row mask and the clamped-duplicate-block path.
    # (3) Shape whose numel is not a multiple of 128 (lane-tail pad path).
    shapes = [(2, 4, 16, 16), (2, 5, 250, 128), (1, 2, 25, 19)]
    for s in shapes:
        key, k1, k2 = jax.random.split(key, 3)
        output = jax.random.uniform(k1, s, jnp.float32, minval=0.1, maxval=2.0)
        target = jax.random.uniform(k2, s, jnp.float32, minval=0.1, maxval=2.0)
        loss = log_squared_loss(output, target)
        jax.block_until_ready(loss)
        ref = _reference(output, target)
        assert jnp.allclose(loss, ref, rtol=1e-4, atol=1e-6), (s, loss, ref)

    print("KERNEL_OK")
</pallas_src>

<mosaic_0001>
module attributes {stable_mosaic.version = 11 : i64} {
  func.func @kernel(%arg0: i32, %arg1: i32, %arg2: memref<16x128xf32, #tpu.memory_space<vmem>>, %arg3: memref<16x128xf32, #tpu.memory_space<vmem>>, %arg4: memref<8x128xf32, #tpu.memory_space<vmem>>) attributes {dimension_semantics = [#tpu.dimension_semantics<parallel>, #tpu.dimension_semantics<arbitrary>], iteration_bounds = array<i64: 1, 1>, scalar_prefetch = 0 : i64, scratch_operands = 0 : i64, tpu.core_type = #tpu.core_type<tc>, window_params = [{transform_indices = @transform_0, window_bounds = array<i64: 16, 128>}, {transform_indices = @transform_1, window_bounds = array<i64: 16, 128>}, {transform_indices = @transform_2, window_bounds = array<i64: 8, 128>}]} {
    %c0_i32 = arith.constant 0 : i32
    %0 = arith.cmpi eq, %arg1, %c0_i32 : i32
    %1 = arith.extui %0 : i1 to i32
    %c0_i32_0 = arith.constant 0 : i32
    %2 = arith.cmpi ne, %1, %c0_i32_0 : i32
    scf.if %2 {
      %cst_9 = arith.constant 0.000000e+00 : f32
      %18 = vector.broadcast %cst_9 : f32 to vector<8x128xf32>
      %c0_10 = arith.constant 0 : index
      %c0_11 = arith.constant 0 : index
      %19 = vector.load %arg4[%c0_10, %c0_11] : memref<8x128xf32, #tpu.memory_space<vmem>>, vector<8x128xf32>
      tpu.vector_store %arg4[%c0_10, %c0_11], %18 {strides = array<i32>} : memref<8x128xf32, #tpu.memory_space<vmem>>, vector<8x128xf32>,
    } else {
    }
    %c0 = arith.constant 0 : index
    %c0_1 = arith.constant 0 : index
    %3 = vector.load %arg2[%c0, %c0_1] : memref<16x128xf32, #tpu.memory_space<vmem>>, vector<16x128xf32>
    %c0_2 = arith.constant 0 : index
    %c0_3 = arith.constant 0 : index
    %4 = vector.load %arg3[%c0_2, %c0_3] : memref<16x128xf32, #tpu.memory_space<vmem>>, vector<16x128xf32>
    %cst = arith.constant 9.99999993E-9 : f32
    %5 = vector.broadcast %cst : f32 to vector<16x128xf32>
    %6 = arith.addf %4, %5 : vector<16x128xf32>
    %cst_4 = arith.constant 9.99999993E-9 : f32
    %7 = vector.broadcast %cst_4 : f32 to vector<16x128xf32>
    %8 = arith.addf %3, %7 : vector<16x128xf32>
    %9 = arith.divf %6, %8 : vector<16x128xf32>
    %10 = math.log %9 : vector<16x128xf32>
    %11 = arith.mulf %10, %10 : vector<16x128xf32>
    %12 = vector.extract_strided_slice %11 {offsets = [0, 0], sizes = [8, 128], strides = [1, 1]} : vector<16x128xf32> to vector<8x128xf32>
    %13 = vector.extract_strided_slice %11 {offsets = [8, 0], sizes = [8, 128], strides = [1, 1]} : vector<16x128xf32> to vector<8x128xf32>
    %14 = arith.addf %12, %13 : vector<8x128xf32>
    %c0_5 = arith.constant 0 : index
    %c0_6 = arith.constant 0 : index
    %15 = vector.load %arg4[%c0_5, %c0_6] : memref<8x128xf32, #tpu.memory_space<vmem>>, vector<8x128xf32>
    %16 = arith.addf %15, %14 : vector<8x128xf32>
    %c0_7 = arith.constant 0 : index
    %c0_8 = arith.constant 0 : index
    %17 = vector.load %arg4[%c0_7, %c0_8] : memref<8x128xf32, #tpu.memory_space<vmem>>, vector<8x128xf32>
    tpu.vector_store %arg4[%c0_7, %c0_8], %16 {strides = array<i32>} : memref<8x128xf32, #tpu.memory_space<vmem>>, vector<8x128xf32>,
    return
  }
  func.func @transform_0(%arg0: i32, %arg1: i32) -> (i32, i32) {
    %c1_i32 = arith.constant 1 : i32
    %0 = arith.muli %arg0, %c1_i32 : i32
    %1 = arith.addi %0, %arg1 : i32
    %c0_i32 = arith.constant 0 : i32
    %c0_i32_0 = arith.constant 0 : i32
    return %1, %c0_i32 : i32, i32
  }
  func.func @transform_1(%arg0: i32, %arg1: i32) -> (i32, i32) {
    %c1_i32 = arith.constant 1 : i32
    %0 = arith.muli %arg0, %c1_i32 : i32
    %1 = arith.addi %0, %arg1 : i32
    %c0_i32 = arith.constant 0 : i32
    %c0_i32_0 = arith.constant 0 : i32
    return %1, %c0_i32 : i32, i32
  }
  func.func @transform_2(%arg0: i32, %arg1: i32) -> (i32, i32) {
    %c0_i32 = arith.constant 0 : i32
    %c0_i32_0 = arith.constant 0 : i32
    return %arg0, %c0_i32 : i32, i32
  }
}

</mosaic_0001>

<llo_original>
// kernel: tpu_custom_call.1
$region0: #{tpu_custom_call.1}
  #allocation0 [shape = 'u32[]', space=smem, size = 0x4, offset = 0x4, fixed_abs, tag = 'smem constant byte address 0x4 - core index']
  #allocation1 [shape = 'u32[144,128]{1,0:T(1,128)}', space=vmem, size = 0x12000, scoped, tag = 'internal scratch']
  %s0 = inlined_call_operand.hbm [shape: f32[16,128], index: 0, kind: input, shape index: {}]
  %s1 = inlined_call_operand.hbm [shape: f32[16,128], index: 1, kind: input, shape index: {}]
  %s2 = inlined_call_operand.hbm [shape: f32[8,128], index: 2, kind: output, shape index: {}]
  %s3 = sld [smem:[#allocation0]]
  $region30: #{tpu_custom_call.1} parent=0
    _
  %s5 = ssub.s32 1, %s3
  %s6 = scalar_select 0, %s5, %s3
  $region1: #{tpu_custom_call.1} parent=0
    #allocation2 [shape = 'u8[8192]{0}', space=vmem, size = 0x2000, scoped, tag = 'input window, operand 0, single buffered']
    #allocation3 [shape = 's32[1]{0}', space=sflag, size = 0x4, scoped, tag = 'scoped memory for tpu_custom_call.1']
    #allocation4 [shape = 's32[1]{0}', space=sflag, size = 0x4, scoped, tag = 'scoped memory for tpu_custom_call.1']
    #allocation5 [shape = 'u8[8192]{0}', space=vmem, size = 0x2000, scoped, tag = 'input window, operand 1, single buffered']
    #allocation6 [shape = 's32[1]{0}', space=sflag, size = 0x4, scoped, tag = 'scoped memory for tpu_custom_call.1']
    #allocation7 [shape = 'u8[4096]{0}', space=vmem, size = 0x1000, scoped, tag = 'output window, operand 0, single buffered']
    %7 = vsyncpa [#allocation3], 0
    %8 = vsyncpa [#allocation6], 0
    %9 = vsyncpa [#allocation4], 0
    // Predicated region
    $region2: #{tpu_custom_call.1} parent=1 // pred_check
      _
    $region3: #{tpu_custom_call.1} parent=1 // pred_check_branch
      %11 = sbr.rel (0) target = $region5
    $region4: #{tpu_custom_call.1} parent=1 // pred_region
      %s12 = sadd.s32 0, 0
      %s13 = smul.u32 2, %s12
      %s15 = ssub.s32 256, 256
      %16 = vsyncadd [#allocation3], %s15
      %s17 = smul.addr %s13, 128
      %s18 = scalar_lea.hbm %s0, %s17
      %s19 = sshll.u32 [#allocation2], 4
      %s20 = int_to_ptr.vmem [resolvable:$true] %s19
      %25 = dma.hbm_to_vmem [thread:$0]  %s18, 256, %s20, [#allocation3], 128, 128, 8
    $region5: #{tpu_custom_call.1} parent=1 // pred_fallthru
      _
    // Predicated region
    $region6: #{tpu_custom_call.1} parent=1 // pred_check
      _
    $region7: #{tpu_custom_call.1} parent=1 // pred_check_branch
      %27 = sbr.rel (0) target = $region9
    $region8: #{tpu_custom_call.1} parent=1 // pred_region
      %s28 = sadd.s32 0, 0
      %s29 = smul.u32 2, %s28
      %s31 = ssub.s32 256, 256
      %32 = vsyncadd [#allocation6], %s31
      %s33 = smul.addr %s29, 128
      %s34 = scalar_lea.hbm %s1, %s33
      %s35 = sshll.u32 [#allocation5], 4
      %s36 = int_to_ptr.vmem [resolvable:$true] %s35
      %41 = dma.hbm_to_vmem [thread:$0]  %s34, 256, %s36, [#allocation6], 128, 128, 8
    $region9: #{tpu_custom_call.1} parent=1 // pred_fallthru
      _
    // Predicated region
    $region10: #{tpu_custom_call.1} parent=1 // pred_check
      _
    $region11: #{tpu_custom_call.1} parent=1 // pred_check_branch
      %43 = sbr.rel (0) target = $region13
    $region12: #{tpu_custom_call.1} parent=1 // pred_region
      %44 = dma.done [#allocation3], 256
    $region13: #{tpu_custom_call.1} parent=1 // pred_fallthru
      _
    // Predicated region
    $region14: #{tpu_custom_call.1} parent=1 // pred_check
      _
    $region15: #{tpu_custom_call.1} parent=1 // pred_check_branch
      %46 = sbr.rel (0) target = $region17
    $region16: #{tpu_custom_call.1} parent=1 // pred_region
      %47 = dma.done [#allocation6], 256
    $region17: #{tpu_custom_call.1} parent=1 // pred_fallthru
      _
    %s48 = sadd.s32 0, 0
    %s49 = smul.u32 2, %s48
    %s50 = sadd.s32 0, 0
    %s51 = smul.u32 2, %s50
    %p52 = scmp.eq.s32.totalorder 0, 0
    // Predicated region
    $region18: #{tpu_custom_call.1} parent=1 // pred_check
      %p53 = pneg %p52
    $region19: #{tpu_custom_call.1} parent=1 // pred_check_branch
      %55 = sbr.rel (%p53) target = $region21
    $region20: #{tpu_custom_call.1} parent=1 // pred_region
      %56 = vst [vmem:[#allocation7] sm:$0xff] 0.0
    $region21: #{tpu_custom_call.1} parent=1 // pred_fallthru
      _
    %v57 = vld [vmem:[#allocation2] sm:$0xff]
    %v58 = vld [vmem:[#allocation2 + $0x8] sm:$0xff]
    %v59 = vld [vmem:[#allocation5] sm:$0xff]
    %v60 = vld [vmem:[#allocation5 + $0x8] sm:$0xff]
    %v61 = vadd.f32 %v59, 1e-08
    %v62 = vadd.f32 %v60, 1e-08
    %v63 = vadd.f32 %v57, 1e-08
    %v64 = vadd.f32 %v58, 1e-08
    %v65 = vrcp.pop %v63
    %v66 = vmul.f32 %v61, %v65
    %v67 = vrcp.pop %v64
    %v68 = vmul.f32 %v62, %v67
    %v69 = vlog2.pop %v66
    %v70 = vmul.f32 %v69, 0.6931472
    %v71 = vlog2.pop %v68
    %v72 = vmul.f32 %v71, 0.6931472
    %v73 = vmul.f32 %v70, %v70
    %v74 = vmul.f32 %v72, %v72
    %v75 = vadd.f32 %v73, %v74
    %v76 = vld [vmem:[#allocation7] sm:$0xff]
    %v77 = vadd.f32 %v76, %v75
    %78 = vst [vmem:[#allocation7] sm:$0xff] %v77
    // Predicated region
    $region22: #{tpu_custom_call.1} parent=1 // pred_check
      _
    $region23: #{tpu_custom_call.1} parent=1 // pred_check_branch
      %80 = sbr.rel (0) target = $region25
    $region24: #{tpu_custom_call.1} parent=1 // pred_region
      %s82 = ssub.s32 128, 128
      %83 = vsyncadd [#allocation4], %s82
      %s85 = sshll.u32 [#allocation7], 4
      %s86 = int_to_ptr.vmem [resolvable:$true] %s85
      %88 = dma.vmem_to_hbm [thread:$0]  %s86, 128, %s2, [#allocation4]
    $region25: #{tpu_custom_call.1} parent=1 // pred_fallthru
      _
    // Predicated region
    $region26: #{tpu_custom_call.1} parent=1 // pred_check
      _
    $region27: #{tpu_custom_call.1} parent=1 // pred_check_branch
      %90 = sbr.rel (0) target = $region29
    $region28: #{tpu_custom_call.1} parent=1 // pred_region
      %91 = dma.done [#allocation4], 128
    $region29: #{tpu_custom_call.1} parent=1 // pred_fallthru
      _
    %92 = vsyncpa [#allocation3], 1
    %93 = vsyncpa [#allocation6], 1
    %94 = vsyncpa [#allocation4], 1

</llo_original>
